<compile_context>
chip_gen: v5e
topology: v5e:2x2
jax: 0.10.0
libtpu: 0.0.40
codegen_flags: <defaults>
</compile_context>

<pallas_src>
import functools

import jax
import jax.numpy as jnp
from jax.experimental import pallas as pl
from jax.experimental.pallas import tpu as pltpu


def _pick_spatial_tile(M: int) -> int:
    """Largest lane-aligned tile (<=1024) that divides H*W; fall back to full."""
    for tm in (1024, 512, 256, 128):
        if M % tm == 0:
            return tm
    return M  # full extent is always a legal block dim


def _shake_train_kernel(mu_ref, x_ref, w1_ref, b1_ref, w2_ref, b2_ref, o_ref):
    # Blocks: x (1, C, tm); w* (C_out, C_in); b* (C_out, 1); mu in SMEM (N,).
    mu = mu_ref[pl.program_id(0)]                       # per-sample scalar
    w1 = w1_ref[...].astype(jnp.float32)
    w2 = w2_ref[...].astype(jnp.float32)
    # Fold the shake mix into the (tiny) weights -> a single matmul per tile.
    w_mix = (w1 + mu * (w2 - w1)).astype(x_ref.dtype)   # (C, C)
    b_mix = b1_ref[...] + mu * (b2_ref[...] - b1_ref[...])  # (C, 1) f32
    acc = jnp.dot(w_mix, x_ref[0], preferred_element_type=jnp.float32)
    o_ref[0] = (acc + b_mix).astype(o_ref.dtype)


def _shake_eval_kernel(x_ref, w_ref, b_ref, o_ref):
    # w/b are already the 0.5*(w1+w2), 0.5*(b1+b2) averages (wrapper-side).
    acc = jnp.dot(w_ref[...], x_ref[0], preferred_element_type=jnp.float32)
    o_ref[0] = (acc + b_ref[...]).astype(o_ref.dtype)


@functools.partial(jax.jit, static_argnames=("training", "compute_dtype"))
def shake_shake(x_nchw, w1, b1, w2, b2, mu, *, training=True,
                compute_dtype=jnp.float32):
    """Shake-Shake forward with fused 1x1-conv branches.

    x_nchw: (N, C, H, W).  w1/w2: (C_in, C_out).  b1/b2: (1, C_out).  mu: (N,).
    """
    N, C, H, W = x_nchw.shape
    M = H * W
    tm = _pick_spatial_tile(M)
    grid = (N, M // tm)

    # NCHW viewed as (N, C, H*W): pure reshape, no transpose / extra HBM pass.
    x = x_nchw.reshape(N, C, M).astype(compute_dtype)
    w1t = w1.T.astype(compute_dtype)            # (C_out, C_in) so out = w^T @ x
    w2t = w2.T.astype(compute_dtype)
    b1c = b1.reshape(C, 1).astype(jnp.float32)  # biases stay f32 (tiny)
    b2c = b2.reshape(C, 1).astype(jnp.float32)

    x_spec = pl.BlockSpec((1, C, tm), lambda n, m: (n, 0, m))
    w_spec = pl.BlockSpec((C, C), lambda n, m: (0, 0))
    b_spec = pl.BlockSpec((C, 1), lambda n, m: (0, 0))
    out_spec = pl.BlockSpec((1, C, tm), lambda n, m: (n, 0, m))
    out_shape = jax.ShapeDtypeStruct((N, C, M), compute_dtype)
    cparams = pltpu.CompilerParams(
        dimension_semantics=("parallel", "parallel"))

    if training:
        out = pl.pallas_call(
            _shake_train_kernel,
            out_shape=out_shape,
            grid_spec=pltpu.PrefetchScalarGridSpec(
                num_scalar_prefetch=0,
                grid=grid,
                in_specs=[
                    pl.BlockSpec(memory_space=pltpu.SMEM),   # mu (N,) f32
                    x_spec, w_spec, b_spec, w_spec, b_spec,
                ],
                out_specs=out_spec,
            ),
            compiler_params=cparams,
        )(mu.astype(jnp.float32), x, w1t, b1c, w2t, b2c)
    else:
        # Eval: 0.5*(a+b) == (0.5*(w1+w2))^T @ x + 0.5*(b1+b2) -> one matmul.
        w_eval = (0.5 * (w1t.astype(jnp.float32)
                         + w2t.astype(jnp.float32))).astype(compute_dtype)
        b_eval = 0.5 * (b1c + b2c)
        out = pl.pallas_call(
            _shake_eval_kernel,
            out_shape=out_shape,
            grid_spec=pltpu.PrefetchScalarGridSpec(
                num_scalar_prefetch=0,
                grid=grid,
                in_specs=[x_spec, w_spec, b_spec],
                out_specs=out_spec,
            ),
            compiler_params=cparams,
        )(x, w_eval, b_eval)

    # (N, C, H*W) -> (N, C, H, W): pure view.
    return out.reshape(N, C, H, W)


if __name__ == "__main__":
    key = jax.random.PRNGKey(0)
    k_x, k_w1, k_b1, k_w2, k_b2, k_mu = jax.random.split(key, 6)

    N, C, H, W = 2, 4, 16, 16
    x = jax.random.normal(k_x, (N, C, H, W), dtype=jnp.float32)

    # Deterministic branch parameters (1x1 conv weights stored as (C_in, C_out)).
    w1 = jax.random.normal(k_w1, (C, C), dtype=jnp.float32) * 0.1
    b1 = jax.random.normal(k_b1, (1, C), dtype=jnp.float32) * 0.1
    w2 = jax.random.normal(k_w2, (C, C), dtype=jnp.float32) * 0.1
    b2 = jax.random.normal(k_b2, (1, C), dtype=jnp.float32) * 0.1

    # Per-sample mu ~ U[0,1), like a.new([N,1,1,1]).uniform_()
    mu = jax.random.uniform(k_mu, (N,), dtype=jnp.float32)

    # ---- training mode (shake mixing), f32 ----
    out_train = jax.block_until_ready(
        shake_shake(x, w1, b1, w2, b2, mu, training=True))
    # ---- eval mode (0.5 * (a + b)), f32 ----
    out_eval = jax.block_until_ready(
        shake_shake(x, w1, b1, w2, b2, mu, training=False))
    # ---- training mode, bf16 compute (HBM-bound fast path) ----
    out_train_bf16 = jax.block_until_ready(
        shake_shake(x, w1, b1, w2, b2, mu, training=True,
                    compute_dtype=jnp.bfloat16))

    # Pure-JAX reference (NCHW, 1x1 conv == channel matmul).
    a = jnp.einsum('nchw,cd->ndhw', x, w1) + b1.reshape(1, C, 1, 1)
    b = jnp.einsum('nchw,cd->ndhw', x, w2) + b2.reshape(1, C, 1, 1)
    ref_train = a + mu[:, None, None, None] * (b - a)
    ref_eval = 0.5 * (a + b)

    assert jnp.allclose(out_train, ref_train, atol=1e-5, rtol=1e-5)
    assert jnp.allclose(out_eval, ref_eval, atol=1e-5, rtol=1e-5)
    assert jnp.allclose(out_train_bf16.astype(jnp.float32), ref_train,
                        atol=3e-2, rtol=3e-2)

    print("KERNEL_OK")
</pallas_src>

<mosaic_0001>
module attributes {stable_mosaic.version = 11 : i64} {
  func.func @_shake_train_kernel(%arg0: i32, %arg1: i32, %arg2: memref<2xf32, #tpu.memory_space<smem>>, %arg3: memref<1x4x256xf32, #tpu.memory_space<vmem>>, %arg4: memref<4x4xf32, #tpu.memory_space<vmem>>, %arg5: memref<4x1xf32, #tpu.memory_space<vmem>>, %arg6: memref<4x4xf32, #tpu.memory_space<vmem>>, %arg7: memref<4x1xf32, #tpu.memory_space<vmem>>, %arg8: memref<1x4x256xf32, #tpu.memory_space<vmem>>) attributes {dimension_semantics = [#tpu.dimension_semantics<parallel>, #tpu.dimension_semantics<parallel>], iteration_bounds = array<i64: 2, 1>, scalar_prefetch = 0 : i64, scratch_operands = 0 : i64, tpu.core_type = #tpu.core_type<tc>, window_params = [{transform_indices = @transform_0, window_bounds = array<i64: 2>}, {transform_indices = @transform_1, window_bounds = array<i64: 1, 4, 256>}, {pipeline_mode = #tpu.pipeline_mode<synchronous>, transform_indices = @transform_2, window_bounds = array<i64: 4, 4>}, {pipeline_mode = #tpu.pipeline_mode<synchronous>, transform_indices = @transform_3, window_bounds = array<i64: 4, 1>}, {pipeline_mode = #tpu.pipeline_mode<synchronous>, transform_indices = @transform_4, window_bounds = array<i64: 4, 4>}, {pipeline_mode = #tpu.pipeline_mode<synchronous>, transform_indices = @transform_5, window_bounds = array<i64: 4, 1>}, {transform_indices = @transform_6, window_bounds = array<i64: 1, 4, 256>}]} {
    %0 = arith.index_cast %arg0 : i32 to index
    %1 = memref.load %arg2[%0] : memref<2xf32, #tpu.memory_space<smem>>
    %c0 = arith.constant 0 : index
    %c0_0 = arith.constant 0 : index
    %2 = vector.load %arg4[%c0, %c0_0] : memref<4x4xf32, #tpu.memory_space<vmem>>, vector<4x4xf32>
    %c0_1 = arith.constant 0 : index
    %c0_2 = arith.constant 0 : index
    %3 = vector.load %arg6[%c0_1, %c0_2] : memref<4x4xf32, #tpu.memory_space<vmem>>, vector<4x4xf32>
    %4 = arith.subf %3, %2 : vector<4x4xf32>
    %5 = vector.broadcast %1 : f32 to vector<4x4xf32>
    %6 = arith.mulf %5, %4 : vector<4x4xf32>
    %7 = arith.addf %2, %6 : vector<4x4xf32>
    %c0_3 = arith.constant 0 : index
    %c0_4 = arith.constant 0 : index
    %8 = vector.load %arg5[%c0_3, %c0_4] : memref<4x1xf32, #tpu.memory_space<vmem>>, vector<4x1xf32>
    %c0_5 = arith.constant 0 : index
    %c0_6 = arith.constant 0 : index
    %9 = vector.load %arg7[%c0_5, %c0_6] : memref<4x1xf32, #tpu.memory_space<vmem>>, vector<4x1xf32>
    %c0_7 = arith.constant 0 : index
    %c0_8 = arith.constant 0 : index
    %10 = vector.load %arg5[%c0_7, %c0_8] : memref<4x1xf32, #tpu.memory_space<vmem>>, vector<4x1xf32>
    %11 = arith.subf %9, %10 : vector<4x1xf32>
    %12 = vector.broadcast %1 : f32 to vector<4x1xf32>
    %13 = arith.mulf %12, %11 : vector<4x1xf32>
    %14 = arith.addf %8, %13 : vector<4x1xf32>
    %c0_9 = arith.constant 0 : index
    %c0_10 = arith.constant 0 : index
    %c0_11 = arith.constant 0 : index
    %15 = vector.load %arg3[%c0_9, %c0_10, %c0_11] : memref<1x4x256xf32, #tpu.memory_space<vmem>>, vector<1x4x256xf32>
    %16 = vector.shape_cast %15 : vector<1x4x256xf32> to vector<4x256xf32>
    %cst = arith.constant dense<0.000000e+00> : vector<4x256xf32>
    %17 = tpu.matmul %7, %16, %cst {dimension_numbers = #tpu.dot_dimension_numbers<[1], [0], [0], [1], [0, 0, 1, 1], [], []>} : vector<4x4xf32>, vector<4x256xf32>, vector<4x256xf32> -> vector<4x256xf32>
    %18 = vector.broadcast %14 : vector<4x1xf32> to vector<4x256xf32>
    %19 = arith.addf %17, %18 : vector<4x256xf32>
    %c0_12 = arith.constant 0 : index
    %c0_13 = arith.constant 0 : index
    %c0_14 = arith.constant 0 : index
    %20 = vector.load %arg8[%c0_12, %c0_13, %c0_14] : memref<1x4x256xf32, #tpu.memory_space<vmem>>, vector<1x4x256xf32>
    %21 = vector.shape_cast %20 : vector<1x4x256xf32> to vector<4x256xf32>
    %22 = vector.shape_cast %19 : vector<4x256xf32> to vector<1x4x256xf32>
    tpu.vector_store %arg8[%c0_12, %c0_13, %c0_14], %22 {strides = array<i32>} : memref<1x4x256xf32, #tpu.memory_space<vmem>>, vector<1x4x256xf32>,
    return
  }
  func.func @transform_0(%arg0: i32, %arg1: i32) -> i32 {
    %c0_i32 = arith.constant 0 : i32
    %c0_i32_0 = arith.constant 0 : i32
    return %c0_i32 : i32
  }
  func.func @transform_1(%arg0: i32, %arg1: i32) -> (i32, i32, i32) {
    %c0_i32 = arith.constant 0 : i32
    %c0_i32_0 = arith.constant 0 : i32
    return %arg0, %c0_i32, %arg1 : i32, i32, i32
  }
  func.func @transform_2(%arg0: i32, %arg1: i32) -> (i32, i32) {
    %c0_i32 = arith.constant 0 : i32
    %c0_i32_0 = arith.constant 0 : i32
    %c0_i32_1 = arith.constant 0 : i32
    return %c0_i32, %c0_i32_0 : i32, i32
  }
  func.func @transform_3(%arg0: i32, %arg1: i32) -> (i32, i32) {
    %c0_i32 = arith.constant 0 : i32
    %c0_i32_0 = arith.constant 0 : i32
    %c0_i32_1 = arith.constant 0 : i32
    return %c0_i32, %c0_i32_0 : i32, i32
  }
  func.func @transform_4(%arg0: i32, %arg1: i32) -> (i32, i32) {
    %c0_i32 = arith.constant 0 : i32
    %c0_i32_0 = arith.constant 0 : i32
    %c0_i32_1 = arith.constant 0 : i32
    return %c0_i32, %c0_i32_0 : i32, i32
  }
  func.func @transform_5(%arg0: i32, %arg1: i32) -> (i32, i32) {
    %c0_i32 = arith.constant 0 : i32
    %c0_i32_0 = arith.constant 0 : i32
    %c0_i32_1 = arith.constant 0 : i32
    return %c0_i32, %c0_i32_0 : i32, i32
  }
  func.func @transform_6(%arg0: i32, %arg1: i32) -> (i32, i32, i32) {
    %c0_i32 = arith.constant 0 : i32
    %c0_i32_0 = arith.constant 0 : i32
    return %arg0, %c0_i32, %arg1 : i32, i32, i32
  }
}

</mosaic_0001>

<llo_original>
// kernel: shake_shake.1
$region0: #{shake_shake.1}
  #allocation0 [shape = 'u32[]', space=smem, size = 0x4, offset = 0x4, fixed_abs, tag = 'smem constant byte address 0x4 - core index']
  #allocation1 [shape = 'u32[72,128]{1,0:T(1,128)}', space=vmem, size = 0x9000, scoped, tag = 'internal scratch']
  %s0 = inlined_call_operand.vmem [shape: f32[2], index: 0, kind: input, shape index: {}]
  %s1 = inlined_call_operand.vmem [shape: f32[2,4,256], index: 1, kind: input, shape index: {}]
  %s2 = inlined_call_operand.vmem [shape: f32[4,4], index: 2, kind: input, shape index: {}]
  %s3 = inlined_call_operand.vmem [shape: f32[4,1], index: 3, kind: input, shape index: {}]
  %s4 = inlined_call_operand.vmem [shape: f32[4,4], index: 4, kind: input, shape index: {}]
  %s5 = inlined_call_operand.vmem [shape: f32[4,1], index: 5, kind: input, shape index: {}]
  %s6 = inlined_call_operand.vmem [shape: f32[2,4,256], index: 6, kind: output, shape index: {}]
  %s7 = sld [smem:[#allocation0]]
  $region61: #{shake_shake.1} parent=0
    _
  %s9 = ssub.s32 1, %s7
  %s10 = scalar_select 0, %s9, %s7
  $region1: #{shake_shake.1} parent=0
    #allocation2 [shape = 'u8[512]{0}', space=smem, size = 0x200, scoped, tag = 'input window, operand 0, single buffered']
    #allocation3 [shape = 's32[2]{0}', space=sflag, size = 0x8, scoped, tag = 'scoped memory for shake_shake.1']
    %11 = vsyncpa [#allocation3], 0
    loop: start=0, step=1, limit=4
    $region2: #{shake_shake.1} parent=1 // loop_pre_header
      _
    $region3: #{shake_shake.1} parent=1 // loop_header
      %s13 = sphi 0, %s17
      %p14 = scmp.ge.s32.totalorder %s13, 4
      %s20 = sphi 0, %s32
      %s21 = sphi 0, %s28
      %s22 = sphi 0, %s20
      %s23 = sphi 0, %s21
      %s24 = sphi 0, %s22
      %s25 = sphi 0, %s23
      %s33 = sphi 0, %s33
      %s35 = sphi 0, %s33
      %s36 = sphi 0, %s35
      %s50 = sphi 0, %s36
      %s58 = sphi 0, %s60
      %s61 = sphi 0, %s58
      %s62 = sphi 0, %s61
      %s78 = sphi 0, %s62
      %s82 = sphi 0, %s82
      %s84 = sphi 0, %s82
      %s85 = sphi 0, %s84
      %s99 = sphi 0, %s85
      %s103 = sphi 0, %s103
      %s105 = sphi 0, %s103
      %s106 = sphi 0, %s105
      %s120 = sphi 0, %s106
      %s124 = sphi 0, %s124
      %s126 = sphi 0, %s124
      %s127 = sphi 0, %s126
      %s141 = sphi 0, %s127
      %s145 = sphi 0, %s145
      %s147 = sphi 0, %s145
      %s148 = sphi 0, %s147
      %s162 = sphi 0, %s148
      %s170 = sphi 0, %s172
      %s173 = sphi 0, %s170
      %s174 = sphi 0, %s173
      %s190 = sphi 0, %s174
    $region4: #{shake_shake.1} parent=1 // loop_header_branch
      %16 = sbr.rel (%p14) target = $region8
    $region5: #{shake_shake.1} parent=1 // loop_body
      %s18 = ssub.s32 %s13, 1
      %s19 = ssub.s32 %s13, 2
      %s26 = sadd.s32 1, %s21
      %p27 = scmp.ge.s32.totalorder %s26, 1
      %s28 = scalar_select %p27, 0, %s26
      %s29 = sadd.s32 1, %s20
      %s30 = scalar_select %p27, %s29, %s20
      %p31 = scmp.ge.s32.totalorder %s30, 2
      %s32 = scalar_select %p31, 0, %s30
      %s34 = sadd.s32 %s33, 1
      %p37 = scmp.eq.s32.totalorder %s13, 1
      %p38 = scmp.ne.s32.totalorder %s33, %s35
      %p39 = scmp.eq.s32.totalorder %s13, 0
      %p40 = por %p38, %p39
      %p41 = scmp.ne.s32.totalorder %s33, %s35
      %p42 = scmp.eq.s32.totalorder %s18, 1
      %p43 = por %p41, %p42
      %p44 = scmp.ne.s32.totalorder %s35, %s36
      %p45 = scmp.eq.s32.totalorder %s18, 0
      %p46 = por %p44, %p45
      %p47 = scmp.ne.s32.totalorder %s35, %s36
      %p48 = scmp.eq.s32.totalorder %s19, 1
      %p49 = por %p47, %p48
      %p51 = scmp.ne.s32.totalorder %s36, %s50
      %p52 = scmp.eq.s32.totalorder %s19, 0
      %p53 = por %p51, %p52
      %s54 = ssub.s32 %s20, %s32
      %s55 = ssub.s32 %s21, %s28
      %s56 = sor.u32 %s54, %s55
      %p57 = scmp.eq.s32.totalorder %s56, 0
      %s59 = sadd.s32 %s58, 1
      %s60 = scalar_select %p57, %s58, %s59
      %p63 = pneg %p57
      %p64 = scmp.eq.s32.totalorder %s13, 1
      %p65 = por %p63, %p64
      %p66 = scmp.ne.s32.totalorder %s58, %s61
      %p67 = scmp.eq.s32.totalorder %s13, 0
      %p68 = por %p66, %p67
      %p69 = scmp.ne.s32.totalorder %s58, %s61
      %p70 = scmp.eq.s32.totalorder %s18, 1
      %p71 = por %p69, %p70
      %p72 = scmp.ne.s32.totalorder %s61, %s62
      %p73 = scmp.eq.s32.totalorder %s18, 0
      %p74 = por %p72, %p73
      %p75 = scmp.ne.s32.totalorder %s61, %s62
      %p76 = scmp.eq.s32.totalorder %s19, 1
      %p77 = por %p75, %p76
      %p79 = scmp.ne.s32.totalorder %s62, %s78
      %p80 = scmp.eq.s32.totalorder %s19, 0
      %p81 = por %p79, %p80
      %s83 = sadd.s32 %s82, 1
      %p86 = scmp.eq.s32.totalorder %s13, 1
      %p87 = scmp.ne.s32.totalorder %s82, %s84
      %p88 = scmp.eq.s32.totalorder %s13, 0
      %p89 = por %p87, %p88
      %p90 = scmp.ne.s32.totalorder %s82, %s84
      %p91 = scmp.eq.s32.totalorder %s18, 1
      %p92 = por %p90, %p91
      %p93 = scmp.ne.s32.totalorder %s84, %s85
      %p94 = scmp.eq.s32.totalorder %s18, 0
      %p95 = por %p93, %p94
      %p96 = scmp.ne.s32.totalorder %s84, %s85
      %p97 = scmp.eq.s32.totalorder %s19, 1
      %p98 = por %p96, %p97
      %p100 = scmp.ne.s32.totalorder %s85, %s99
      %p101 = scmp.eq.s32.totalorder %s19, 0
      %p102 = por %p100, %p101
      %s104 = sadd.s32 %s103, 1
      %p107 = scmp.eq.s32.totalorder %s13, 1
      %p108 = scmp.ne.s32.totalorder %s103, %s105
      %p109 = scmp.eq.s32.totalorder %s13, 0
      %p110 = por %p108, %p109
      %p111 = scmp.ne.s32.totalorder %s103, %s105
      %p112 = scmp.eq.s32.totalorder %s18, 1
      %p113 = por %p111, %p112
      %p114 = scmp.ne.s32.totalorder %s105, %s106
      %p115 = scmp.eq.s32.totalorder %s18, 0
      %p116 = por %p114, %p115
      %p117 = scmp.ne.s32.totalorder %s105, %s106
      %p118 = scmp.eq.s32.totalorder %s19, 1
      %p119 = por %p117, %p118
      %p121 = scmp.ne.s32.totalorder %s106, %s120
      %p122 = scmp.eq.s32.totalorder %s19, 0
      %p123 = por %p121, %p122
      %s125 = sadd.s32 %s124, 1
      %p128 = scmp.eq.s32.totalorder %s13, 1
      %p129 = scmp.ne.s32.totalorder %s124, %s126
      %p130 = scmp.eq.s32.totalorder %s13, 0
      %p131 = por %p129, %p130
      %p132 = scmp.ne.s32.totalorder %s124, %s126
      %p133 = scmp.eq.s32.totalorder %s18, 1
      %p134 = por %p132, %p133
      %p135 = scmp.ne.s32.totalorder %s126, %s127
      %p136 = scmp.eq.s32.totalorder %s18, 0
      %p137 = por %p135, %p136
      %p138 = scmp.ne.s32.totalorder %s126, %s127
      %p139 = scmp.eq.s32.totalorder %s19, 1
      %p140 = por %p138, %p139
      %p142 = scmp.ne.s32.totalorder %s127, %s141
      %p143 = scmp.eq.s32.totalorder %s19, 0
      %p144 = por %p142, %p143
      %s146 = sadd.s32 %s145, 1
      %p149 = scmp.eq.s32.totalorder %s13, 1
      %p150 = scmp.ne.s32.totalorder %s145, %s147
      %p151 = scmp.eq.s32.totalorder %s13, 0
      %p152 = por %p150, %p151
      %p153 = scmp.ne.s32.totalorder %s145, %s147
      %p154 = scmp.eq.s32.totalorder %s18, 1
      %p155 = por %p153, %p154
      %p156 = scmp.ne.s32.totalorder %s147, %s148
      %p157 = scmp.eq.s32.totalorder %s18, 0
      %p158 = por %p156, %p157
      %p159 = scmp.ne.s32.totalorder %s147, %s148
      %p160 = scmp.eq.s32.totalorder %s19, 1
      %p161 = por %p159, %p160
      %p163 = scmp.ne.s32.totalorder %s148, %s162
      %p164 = scmp.eq.s32.totalorder %s19, 0
      %p165 = por %p163, %p164
      %s166 = ssub.s32 %s20, %s32
      %s167 = ssub.s32 %s21, %s28
      %s168 = sor.u32 %s166, %s167
      %p169 = scmp.eq.s32.totalorder %s168, 0
      %s171 = sadd.s32 %s170, 1
      %s172 = scalar_select %p169, %s170, %s171
      %p175 = pneg %p169
      %p176 = scmp.eq.s32.totalorder %s13, 1
      %p177 = por %p175, %p176
      %p178 = scmp.ne.s32.totalorder %s170, %s173
      %p179 = scmp.eq.s32.totalorder %s13, 0
      %p180 = por %p178, %p179
      %p181 = scmp.ne.s32.totalorder %s170, %s173
      %p182 = scmp.eq.s32.totalorder %s18, 1
      %p183 = por %p181, %p182
      %p184 = scmp.ne.s32.totalorder %s173, %s174
      %p185 = scmp.eq.s32.totalorder %s18, 0
      %p186 = por %p184, %p185
      %p187 = scmp.ne.s32.totalorder %s173, %s174
      %p188 = scmp.eq.s32.totalorder %s19, 1
      %p189 = por %p187, %p188
      %p191 = scmp.ne.s32.totalorder %s174, %s190
      %p192 = scmp.eq.s32.totalorder %s19, 0
      %p193 = por %p191, %p192
      %p194 = scmp.le.s32.totalorder 1, %s13
      %p195 = scmp.lt.s32.totalorder %s13, 3
      %p196 = pnand %p194, %p195
      %p197 = pneg %p196
      // Predicated region
      $region9: #{shake_shake.1} parent=5 // pred_check
        _
      $region10: #{shake_shake.1} parent=5 // pred_check_branch
        %199 = sbr.rel (%p196) target = $region12
      $region11: #{shake_shake.1} parent=5 // pred_region
        %s200 = ssub.s32 %s13, 1
        // Predicated region
        $region13: #{shake_shake.1} parent=11 // pred_check
          %p201 = pneg %p46
        $region14: #{shake_shake.1} parent=11 // pred_check_branch
          %203 = sbr.rel (%p201) target = $region16
        $region15: #{shake_shake.1} parent=11 // pred_region
          %205 = vsyncadd [#allocation3], 0
          %s207 = sshll.u32 %s0, 4
          %s208 = int_to_ptr.vmem [resolvable:$true] %s207
          %210 = dma.vmem_to_smem %s208, 16, [#allocation2], [#allocation3]
        $region16: #{shake_shake.1} parent=11 // pred_fallthru
          _
        // Predicated region
        $region17: #{shake_shake.1} parent=11 // pred_check
          %p211 = pneg %p95
        $region18: #{shake_shake.1} parent=11 // pred_check_branch
          %213 = sbr.rel (%p211) target = $region20
        $region19: #{shake_shake.1} parent=11 // pred_region
          _
        $region20: #{shake_shake.1} parent=11 // pred_fallthru
          _
        // Predicated region
        $region21: #{shake_shake.1} parent=11 // pred_check
          %p214 = pneg %p116
        $region22: #{shake_shake.1} parent=11 // pred_check_branch
          %216 = sbr.rel (%p214) target = $region24
        $region23: #{shake_shake.1} parent=11 // pred_region
          _
        $region24: #{shake_shake.1} parent=11 // pred_fallthru
          _
        // Predicated region
        $region25: #{shake_shake.1} parent=11 // pred_check
          %p217 = pneg %p137
        $region26: #{shake_shake.1} parent=11 // pred_check_branch
          %219 = sbr.rel (%p217) target = $region28
        $region27: #{shake_shake.1} parent=11 // pred_region
          _
        $region28: #{shake_shake.1} parent=11 // pred_fallthru
          _
        // Predicated region
        $region29: #{shake_shake.1} parent=11 // pred_check
          %p220 = pneg %p158
        $region30: #{shake_shake.1} parent=11 // pred_check_branch
          %222 = sbr.rel (%p220) target = $region32
        $region31: #{shake_shake.1} parent=11 // pred_region
          _
        $region32: #{shake_shake.1} parent=11 // pred_fallthru
          _
      $region12: #{shake_shake.1} parent=5 // pred_fallthru
        _
      %p223 = scmp.lt.s32.totalorder %s13, 2
      // Predicated region
      $region33: #{shake_shake.1} parent=5 // pred_check
        %p224 = pneg %p223
      $region34: #{shake_shake.1} parent=5 // pred_check_branch
        %226 = sbr.rel (%p224) target = $region36
      $region35: #{shake_shake.1} parent=5 // pred_region
        // Predicated region
        $region37: #{shake_shake.1} parent=35 // pred_check
          %p227 = pneg %p68
        $region38: #{shake_shake.1} parent=35 // pred_check_branch
          %229 = sbr.rel (%p227) target = $region40
        $region39: #{shake_shake.1} parent=35 // pred_region
          %s230 = smul.u32 2, %s21
          %p231 = scmp.lt.s32.totalorder %s20, 1
          %s232 = scalar_select %p231, %s20, 1
          %p233 = scmp.lt.s32.totalorder %s230, 1
          %s234 = scalar_select %p233, %s230, 1
          %s235 = smul.addr %s232, 2
          %s236 = sadd.s32 %s234, %s235
          %s237 = smul.addr %s236, 4
          %s238 = scalar_lea.vmem %s1, %s237
          %s239 = smul.u32 2, %s21
        $region40: #{shake_shake.1} parent=35 // pred_fallthru
          _
      $region36: #{shake_shake.1} parent=5 // pred_fallthru
        _
      %p240 = scmp.le.s32.totalorder 1, %s13
      %p241 = scmp.lt.s32.totalorder %s13, 3
      %p242 = pnand %p240, %p241
      %p243 = pneg %p242
      // Predicated region
      $region41: #{shake_shake.1} parent=5 // pred_check
        _
      $region42: #{shake_shake.1} parent=5 // pred_check_branch
        %245 = sbr.rel (%p242) target = $region44
      $region43: #{shake_shake.1} parent=5 // pred_region
        %s246 = ssub.s32 %s13, 1
        // Predicated region
        $region45: #{shake_shake.1} parent=43 // pred_check
          %p247 = pneg %p46
        $region46: #{shake_shake.1} parent=43 // pred_check_branch
          %249 = sbr.rel (%p247) target = $region48
        $region47: #{shake_shake.1} parent=43 // pred_region
          %251 = dma.done [#allocation3], 16
        $region48: #{shake_shake.1} parent=43 // pred_fallthru
          _
        %252 = sfence
        %p253 = pneg %p46
        %p254 = pneg %p43
        %s255 = smul.u32 2, %s23
        %p256 = scmp.lt.s32.totalorder %s22, 1
        %s257 = scalar_select %p256, %s22, 1
        %p258 = scmp.lt.s32.totalorder %s255, 1
        %s259 = scalar_select %p258, %s255, 1
        %s260 = smul.addr %s257, 2
        %s261 = sadd.s32 %s259, %s260
        %s262 = smul.addr %s261, 4
        %s263 = scalar_lea.vmem %s1, %s262
        %p264 = pneg %p74
        %p265 = pneg %p71
        %p266 = pneg %p95
        %p267 = pneg %p92
        %p268 = pneg %p116
        %p269 = pneg %p113
        %p270 = pneg %p137
        %p271 = pneg %p134
        %p272 = pneg %p158
        %p273 = pneg %p155
        %p274 = pneg %p186
        %p275 = pneg %p183
        %s276 = smul.u32 2, %s23
        %p277 = scmp.lt.s32.totalorder %s22, 1
        %s278 = scalar_select %p277, %s22, 1
        %p279 = scmp.lt.s32.totalorder %s276, 1
        %s280 = scalar_select %p279, %s276, 1
        %s281 = smul.addr %s278, 2
        %s282 = sadd.s32 %s280, %s281
        %s283 = smul.addr %s282, 4
        %s284 = scalar_lea.vmem %s6, %s283
        %s285 = smul.u32 2, %s23
        %p286 = scmp.lt.s32.totalorder %s22, 1
        %s287 = scalar_select %p286, %s22, 1
        %p288 = scmp.lt.s32.totalorder %s285, 1
        %s289 = scalar_select %p288, %s285, 1
        %s290 = smul.addr %s287, 2
        %s291 = sadd.s32 %s289, %s290
        %s292 = smul.addr %s291, 4
        %s293 = scalar_lea.vmem %s1, %s292
        %s294 = smul.u32 2, %s23
        %s295 = smul.u32 2, %s23
        %p296 = scmp.lt.s32.totalorder %s22, 1
        %s297 = scalar_select %p296, %s22, 1
        %p298 = scmp.lt.s32.totalorder %s295, 1
        %s299 = scalar_select %p298, %s295, 1
        %s300 = smul.addr %s297, 2
        %s301 = sadd.s32 %s299, %s300
        %s302 = smul.addr %s301, 4
        %s303 = scalar_lea.vmem %s6, %s302
        %s304 = smul.u32 2, %s23
        %s305 = sld [smem:[#allocation2 + %s22]]
        %v306 = vld [vmem:[%s2] sm:$0xf]
        %v307 = vld [vmem:[%s4] sm:$0xf]
        %v308 = vsub.f32 %v307, %v306
        %v309 = vstv %s305
        %v310 = vmul.f32 %v309, %v308
        %v311 = vadd.f32 %v306, %v310
        %v312 = vld [vmem:[%s3] sm:$0xf]
        %v313 = vld [vmem:[%s5] sm:$0xf]
        %v314 = vsub.f32 %v313, %v312
        %v315 = vmul.f32 %v309, %v314
        %v316 = vadd.f32 %v312, %v315
        %v317 = vld [vmem:[%s293] sm:$0xff]
        %319 = vset.pattern.permute.xlu0 0
        %320 = vperm.xlu0 %319, %v316
        %v321 = vpop.permute.xlu0 %320
        %324 = vst [vmem:[#allocation1] ss:$2 sm:$0xff] %v317
        %v325 = vld.sshfl [vmem:[#allocation1] sm:$0xff pattern:$0x75316420]
        %v326 = vld.sshfl [vmem:[#allocation1 + $0x8] sm:$0xff pattern:$0x75316420]
        %vm327 = vcmask 31744
        %v329 = vsel %vm327, %v311, 0
        %vm331 = vcmask 1043456
        %v332 = vsel %vm331, %v325, 0
        %v334 = vsel %vm331, %v326, 0
        %336 = vmatpush.msra.mxu0 0.0
        %337 = vmatpush.msra.mxu0 0.0
        %338 = vmatpush.msra.mxu0 0.0
        %339 = vmatpush.msra.mxu0 0.0
        %340 = vmatpush.msra.mxu0 0.0
        %341 = vmatpush.msra.mxu0 0.0
        %342 = vmatpush.msra.mxu0 0.0
        %343 = vmatpush.msra.mxu0 0.0
        %344 = vmatpush.msra.mxu0 0.0
        %345 = vmatpush.msra.mxu0 0.0
        %346 = vmatpush.msra.mxu0 0.0
        %347 = vmatpush.msra.mxu0 0.0
        %348 = vmatpush.msra.mxu0 0.0
        %349 = vmatpush.msra.mxu0 0.0
        %350 = vmatpush.msra.mxu0 0.0
        %351 = vmatpush.msra.mxu0 %v332
        %352 = vmatmul.f32.gmra.mxu0 %v329
        %v353 = vpop.f32.mrf.mxu0
        %v354 = vadd.f32 %v321, %v353
        %355 = vdwg.mxu0
        %356 = vmatpush.msra.mxu0 0.0
        %357 = vmatpush.msra.mxu0 0.0
        %358 = vmatpush.msra.mxu0 0.0
        %359 = vmatpush.msra.mxu0 0.0
        %360 = vmatpush.msra.mxu0 0.0
        %361 = vmatpush.msra.mxu0 0.0
        %362 = vmatpush.msra.mxu0 0.0
        %363 = vmatpush.msra.mxu0 0.0
        %364 = vmatpush.msra.mxu0 0.0
        %365 = vmatpush.msra.mxu0 0.0
        %366 = vmatpush.msra.mxu0 0.0
        %367 = vmatpush.msra.mxu0 0.0
        %368 = vmatpush.msra.mxu0 0.0
        %369 = vmatpush.msra.mxu0 0.0
        %370 = vmatpush.msra.mxu0 0.0
        %371 = vmatpush.msra.mxu0 %v334
        %372 = vmatmul.f32.gmra.mxu0 %v329
        %v373 = vpop.f32.mrf.mxu0
        %v374 = vadd.f32 %v321, %v373
        %375 = vdwg.mxu0
        %v378 = vrot.slane %v374, 4
        %v379 = vsel %vm331, %v354, %v378
        %381 = vst [vmem:[%s303] sm:$0xff] %v379
        %s382 = smul.u32 2, %s23
        %p383 = scmp.lt.s32.totalorder %s22, 1
        %s384 = scalar_select %p383, %s22, 1
        %p385 = scmp.lt.s32.totalorder %s382, 1
        %s386 = scalar_select %p385, %s382, 1
        %s387 = smul.addr %s384, 2
        %s388 = sadd.s32 %s386, %s387
        %s389 = smul.addr %s388, 4
        %s390 = scalar_lea.vmem %s6, %s389
        // Predicated region
        $region49: #{shake_shake.1} parent=43 // pred_check
          %p391 = pneg %p183
        $region50: #{shake_shake.1} parent=43 // pred_check_branch
          %393 = sbr.rel (%p391) target = $region52
        $region51: #{shake_shake.1} parent=43 // pred_region
          %s394 = smul.u32 2, %s23
        $region52: #{shake_shake.1} parent=43 // pred_fallthru
          _
      $region44: #{shake_shake.1} parent=5 // pred_fallthru
        _
      %p395 = scmp.le.s32.totalorder 2, %s13
      // Predicated region
      $region53: #{shake_shake.1} parent=5 // pred_check
        %p396 = pneg %p395
      $region54: #{shake_shake.1} parent=5 // pred_check_branch
        %398 = sbr.rel (%p396) target = $region56
      $region55: #{shake_shake.1} parent=5 // pred_region
        %s399 = ssub.s32 %s13, 2
        // Predicated region
        $region57: #{shake_shake.1} parent=55 // pred_check
          %p400 = pneg %p189
        $region58: #{shake_shake.1} parent=55 // pred_check_branch
          %402 = sbr.rel (%p400) target = $region60
        $region59: #{shake_shake.1} parent=55 // pred_region
          %s403 = smul.u32 2, %s25
          %p404 = scmp.lt.s32.totalorder %s24, 1
          %s405 = scalar_select %p404, %s24, 1
          %p406 = scmp.lt.s32.totalorder %s403, 1
          %s407 = scalar_select %p406, %s403, 1
          %s408 = smul.addr %s405, 2
          %s409 = sadd.s32 %s407, %s408
          %s410 = smul.addr %s409, 4
          %s411 = scalar_lea.vmem %s6, %s410
        $region60: #{shake_shake.1} parent=55 // pred_fallthru
          _
      $region56: #{shake_shake.1} parent=5 // pred_fallthru
        _
    $region6: #{shake_shake.1} parent=1 // loop_footer
      %s17 = sadd.s32 1, %s13
    $region7: #{shake_shake.1} parent=1 // loop_footer_branch
      %12 = sbr.rel target = $region3
    $region8: #{shake_shake.1} parent=1 // loop_exit
      _
    %412 = vsyncpa [#allocation3], 1
    %s413 = scalar_lea.sflag [#allocation3], 1
    %414 = vsyncpa %s413, 1

</llo_original>
